<compile_context>
chip_gen: v6e
topology: v6e:2x2x1
jax: 0.10.0
libtpu: 0.0.40
codegen_flags: <defaults>
</compile_context>

<pallas_src>
import functools

import numpy as np
import jax
import jax.numpy as jnp
from jax.experimental import pallas as pl
from jax.experimental.pallas import tpu as pltpu


def _upconv_kernel(x_ref, w_ref, b_ref, o_ref, *, K, Lt, stride):
    """One (batch, L-tile) step.

    x_ref: (C_in, W_in)      gathered input window (upsample+reflect already applied)
    w_ref: (C_out, K*C_in)   tap-major flattened weight (resident across the grid)
    b_ref: (C_out, 1)        bias (resident)
    o_ref: (C_out, Lt)       lane-dense output tile
    """
    # Build the (K*C_in, Lt) im2col RHS by stacking the K shifted tap slices,
    # read directly from the ref (no whole-tile value materialization).
    if stride == 1:
        taps = [x_ref[:, pl.ds(t, Lt)] for t in range(K)]
    else:
        taps = [x_ref[:, pl.ds(t, Lt, stride=stride)] for t in range(K)]
    cols = jnp.concatenate(taps, axis=0)                       # (K*C_in, Lt)

    acc = jnp.dot(w_ref[...], cols, preferred_element_type=jnp.float32)
    o_ref[...] = (acc + b_ref[...]).astype(o_ref.dtype)


def _fused_gather_indices(L, upsample, pad, stride, K, n_tiles, Lt, W_in):
    """Source index (into the ORIGINAL length-L signal) for every column of every
    per-tile input window: fuses nearest upsample + ReflectionPad1d + tiling halo."""
    L_up = L * upsample
    j = np.arange(n_tiles)[:, None]                # tile index
    m = np.arange(W_in)[None, :]                   # position within the tile window
    p = j * (Lt * stride) + m                      # position in padded, upsampled signal
    q = p - pad                                    # position in upsampled signal
    q = np.where(q < 0, -q, q)                     # reflect left edge (torch ReflectionPad1d)
    q = np.where(q >= L_up, 2 * (L_up - 1) - q, q)  # reflect right edge
    q = np.clip(q, 0, L_up - 1)                    # clamp tail cols from L_out rounding (unused)
    src = q // upsample                            # nearest-neighbour upsample: idx // scale
    return src.reshape(-1).astype(np.int32)


def upsample_conv_layer(x, weight, bias, *, kernel_size, stride=1, upsample=None):
    """Matches torch UpsampleConvLayer.forward for x of shape (N, C_in, L)."""
    x = x.astype(jnp.float32)
    weight = weight.astype(jnp.float32)
    bias = bias.astype(jnp.float32)

    N, C_in, L = x.shape
    C_out, _, K = weight.shape
    assert K == kernel_size
    u = int(upsample) if upsample else 1
    L_up = L * u
    pad = K // 2
    assert pad < L_up, "reflection pad requires pad < upsampled length"
    L_pad = L_up + 2 * pad
    L_out = (L_pad - K) // stride + 1

    # Lane-aligned output tile (multiples of 256 fill the v6e/v7x MXU; 128 floor).
    if L_out >= 512:
        Lt = 512
    elif L_out >= 256:
        Lt = 256
    else:
        Lt = 128
    n_tiles = pl.cdiv(L_out, Lt)
    L_out_pad = n_tiles * Lt
    W_in = stride * (Lt - 1) + K                   # input window per tile (incl. K-1 halo)

    # --- Fused upsample + reflection-pad + tile/halo layout: ONE gather. ---
    src = _fused_gather_indices(L, u, pad, stride, K, n_tiles, Lt, W_in)
    x_cols = jnp.take(x, jnp.asarray(src), axis=-1)            # (N, C_in, n_tiles*W_in)
    x_cols = x_cols.reshape(N, C_in, n_tiles, W_in).transpose(0, 2, 1, 3)  # (N, T, C_in, W_in)

    # Weight layout transform in the wrapper: row index of the im2col RHS is t*C_in + c.
    w2 = jnp.transpose(weight, (0, 2, 1)).reshape(C_out, K * C_in)  # (C_out, K*C_in)
    b2 = bias.reshape(C_out, 1)

    # Explicit VMEM budget (sized for v7x's 64 MiB physical / 32 MiB scoped default).
    itemsize = 4
    est_vmem = itemsize * (
        2 * (C_in * W_in + C_out * Lt)             # double-buffered in/out tiles
        + C_out * K * C_in + C_out                 # resident weight + bias
        + (K * C_in + C_out) * Lt                  # im2col temp + f32 accumulator
    )
    vmem_limit = int(min(48 * 2**20, max(16 * 2**20, 4 * est_vmem)))

    cost = pl.CostEstimate(
        flops=2 * N * C_out * K * C_in * L_out_pad,
        transcendentals=0,
        bytes_accessed=itemsize * (
            N * n_tiles * C_in * W_in + C_out * K * C_in + C_out + N * C_out * L_out_pad
        ),
    )

    kernel = functools.partial(_upconv_kernel, K=K, Lt=Lt, stride=stride)
    out = pl.pallas_call(
        kernel,
        out_shape=jax.ShapeDtypeStruct((N, C_out, L_out_pad), jnp.float32),
        grid=(N, n_tiles),
        in_specs=[
            # per-(batch, tile) input window; leading dims squeezed out of the kernel ref
            pl.BlockSpec((None, None, C_in, W_in), lambda n, j: (n, j, 0, 0)),
            pl.BlockSpec((C_out, K * C_in), lambda n, j: (0, 0)),   # resident weight
            pl.BlockSpec((C_out, 1), lambda n, j: (0, 0)),          # resident bias
        ],
        out_specs=pl.BlockSpec((None, C_out, Lt), lambda n, j: (n, 0, j)),
        compiler_params=pltpu.CompilerParams(
            dimension_semantics=("parallel", "parallel"),
            vmem_limit_bytes=vmem_limit,
        ),
        cost_estimate=cost,
    )(x_cols, w2, b2)

    # TODO(synk): tile C_out as a third grid axis for very large channel counts.
    return out[:, :, :L_out]


def _reference(x, weight, bias, *, kernel_size, stride, upsample=None):
    x = x.astype(jnp.float32)
    if upsample:
        x = jnp.repeat(x, int(upsample), axis=-1)
    pad = kernel_size // 2
    xp = jnp.pad(x, ((0, 0), (0, 0), (pad, pad)), mode="reflect")
    out = jax.lax.conv_general_dilated(
        xp, weight.astype(jnp.float32),
        window_strides=(stride,), padding="VALID",
        dimension_numbers=("NCH", "OIH", "NCH"),
    )
    return out + bias[None, :, None]


if __name__ == "__main__":
    key = jax.random.PRNGKey(0)
    N, C_in, C_out, L = 2, 4, 8, 16
    kernel_size, stride, upsample = 3, 1, 2

    k1, k2, k3 = jax.random.split(key, 3)
    x = jax.random.normal(k1, (N, C_in, L), dtype=jnp.float32)
    # deterministic init matching torch.nn.Conv1d default (uniform +/- 1/sqrt(fan_in))
    fan_in = C_in * kernel_size
    bound = 1.0 / (fan_in ** 0.5)
    weight = jax.random.uniform(
        k2, (C_out, C_in, kernel_size), jnp.float32, -bound, bound
    )
    bias = jax.random.uniform(k3, (C_out,), jnp.float32, -bound, bound)

    out = upsample_conv_layer(
        x, weight, bias, kernel_size=kernel_size, stride=stride, upsample=upsample
    )
    out = jax.block_until_ready(out)

    ref = _reference(
        x, weight, bias, kernel_size=kernel_size, stride=stride, upsample=upsample
    )
    assert out.shape == (N, C_out, L * upsample), out.shape
    assert jnp.allclose(out, ref, atol=1e-5, rtol=1e-5), "mismatch vs reference conv"

    print("KERNEL_OK")
</pallas_src>

<mosaic_0001>
module attributes {stable_mosaic.version = 11 : i64} {
  func.func @_upconv_kernel(%arg0: i32, %arg1: i32, %arg2: memref<1x1x4x130xf32, #tpu.memory_space<vmem>>, %arg3: memref<8x12xf32, #tpu.memory_space<vmem>>, %arg4: memref<8x1xf32, #tpu.memory_space<vmem>>, %arg5: memref<1x8x128xf32, #tpu.memory_space<vmem>>) attributes {dimension_semantics = [#tpu.dimension_semantics<parallel>, #tpu.dimension_semantics<parallel>], iteration_bounds = array<i64: 2, 1>, scalar_prefetch = 0 : i64, scratch_operands = 0 : i64, tpu.core_type = #tpu.core_type<tc>, window_params = [{transform_indices = @transform_0, window_bounds = array<i64: 1, 1, 4, 130>}, {pipeline_mode = #tpu.pipeline_mode<synchronous>, transform_indices = @transform_1, window_bounds = array<i64: 8, 12>}, {pipeline_mode = #tpu.pipeline_mode<synchronous>, transform_indices = @transform_2, window_bounds = array<i64: 8, 1>}, {transform_indices = @transform_3, window_bounds = array<i64: 1, 8, 128>}]} {
    %c0 = arith.constant 0 : index
    %c0_0 = arith.constant 0 : index
    %c0_1 = arith.constant 0 : index
    %c0_2 = arith.constant 0 : index
    %0 = vector.load %arg2[%c0, %c0_0, %c0_1, %c0_2] : memref<1x1x4x130xf32, #tpu.memory_space<vmem>>, vector<1x1x4x128xf32>
    %1 = vector.shape_cast %0 : vector<1x1x4x128xf32> to vector<4x128xf32>
    %c0_3 = arith.constant 0 : index
    %c0_4 = arith.constant 0 : index
    %c0_5 = arith.constant 0 : index
    %c1 = arith.constant 1 : index
    %2 = vector.load %arg2[%c0_3, %c0_4, %c0_5, %c1] : memref<1x1x4x130xf32, #tpu.memory_space<vmem>>, vector<1x1x4x128xf32>
    %3 = vector.shape_cast %2 : vector<1x1x4x128xf32> to vector<4x128xf32>
    %c0_6 = arith.constant 0 : index
    %c0_7 = arith.constant 0 : index
    %c0_8 = arith.constant 0 : index
    %c2 = arith.constant 2 : index
    %4 = vector.load %arg2[%c0_6, %c0_7, %c0_8, %c2] : memref<1x1x4x130xf32, #tpu.memory_space<vmem>>, vector<1x1x4x128xf32>
    %5 = vector.shape_cast %4 : vector<1x1x4x128xf32> to vector<4x128xf32>
    %6 = tpu.concatenate %1, %3, %5 in 0 : vector<4x128xf32>, vector<4x128xf32>, vector<4x128xf32> -> vector<12x128xf32>
    %c0_9 = arith.constant 0 : index
    %c0_10 = arith.constant 0 : index
    %7 = vector.load %arg3[%c0_9, %c0_10] : memref<8x12xf32, #tpu.memory_space<vmem>>, vector<8x12xf32>
    %cst = arith.constant dense<0.000000e+00> : vector<8x128xf32>
    %8 = tpu.matmul %7, %6, %cst {dimension_numbers = #tpu.dot_dimension_numbers<[1], [0], [0], [1], [0, 0, 1, 1], [], []>} : vector<8x12xf32>, vector<12x128xf32>, vector<8x128xf32> -> vector<8x128xf32>
    %c0_11 = arith.constant 0 : index
    %c0_12 = arith.constant 0 : index
    %9 = vector.load %arg4[%c0_11, %c0_12] : memref<8x1xf32, #tpu.memory_space<vmem>>, vector<8x1xf32>
    %10 = vector.broadcast %9 : vector<8x1xf32> to vector<8x128xf32>
    %11 = arith.addf %8, %10 : vector<8x128xf32>
    %c0_13 = arith.constant 0 : index
    %c0_14 = arith.constant 0 : index
    %c0_15 = arith.constant 0 : index
    %12 = vector.load %arg5[%c0_13, %c0_14, %c0_15] : memref<1x8x128xf32, #tpu.memory_space<vmem>>, vector<1x8x128xf32>
    %13 = vector.shape_cast %12 : vector<1x8x128xf32> to vector<8x128xf32>
    %14 = vector.shape_cast %11 : vector<8x128xf32> to vector<1x8x128xf32>
    tpu.vector_store %arg5[%c0_13, %c0_14, %c0_15], %14 {strides = array<i32>} : memref<1x8x128xf32, #tpu.memory_space<vmem>>, vector<1x8x128xf32>,
    return
  }
  func.func @transform_0(%arg0: i32, %arg1: i32) -> (i32, i32, i32, i32) {
    %c0_i32 = arith.constant 0 : i32
    %c0_i32_0 = arith.constant 0 : i32
    %c0_i32_1 = arith.constant 0 : i32
    return %arg0, %arg1, %c0_i32, %c0_i32_0 : i32, i32, i32, i32
  }
  func.func @transform_1(%arg0: i32, %arg1: i32) -> (i32, i32) {
    %c0_i32 = arith.constant 0 : i32
    %c0_i32_0 = arith.constant 0 : i32
    %c0_i32_1 = arith.constant 0 : i32
    return %c0_i32, %c0_i32_0 : i32, i32
  }
  func.func @transform_2(%arg0: i32, %arg1: i32) -> (i32, i32) {
    %c0_i32 = arith.constant 0 : i32
    %c0_i32_0 = arith.constant 0 : i32
    %c0_i32_1 = arith.constant 0 : i32
    return %c0_i32, %c0_i32_0 : i32, i32
  }
  func.func @transform_3(%arg0: i32, %arg1: i32) -> (i32, i32, i32) {
    %c0_i32 = arith.constant 0 : i32
    %c0_i32_0 = arith.constant 0 : i32
    return %arg0, %c0_i32, %arg1 : i32, i32, i32
  }
}

</mosaic_0001>

<llo_original>
// kernel: tpu_custom_call.1
$region0: #{tpu_custom_call.1}
  #allocation0 [shape = 'u32[]', space=smem, size = 0x4, offset = 0x4, fixed_abs, tag = 'smem constant byte address 0x4 - core index']
  #allocation1 [shape = 'u32[144,128]{1,0:T(1,128)}', space=vmem, size = 0x12000, scoped, tag = 'internal scratch']
  %s0 = inlined_call_operand.hbm [shape: f32[2,1,4,130], index: 0, kind: input, shape index: {}]
  %s1 = inlined_call_operand.vmem [shape: f32[8,12], index: 1, kind: input, shape index: {}]
  %s2 = inlined_call_operand.vmem [shape: f32[8,1], index: 2, kind: input, shape index: {}]
  %s3 = inlined_call_operand.hbm [shape: f32[2,8,128], index: 3, kind: output, shape index: {}]
  %s4 = sld [smem:[#allocation0]]
  $region49: #{tpu_custom_call.1} parent=0
    _
  %s6 = ssub.s32 1, %s4
  %s7 = scalar_select 0, %s6, %s4
  $region1: #{tpu_custom_call.1} parent=0
    #allocation2 [shape = 'u8[8192]{0}', space=vmem, size = 0x2000, scoped, tag = 'input window, operand 0']
    #allocation3 [shape = 's32[2]{0}', space=sflag, size = 0x8, scoped, tag = 'scoped memory for tpu_custom_call.1']
    #allocation4 [shape = 's32[2]{0}', space=sflag, size = 0x8, scoped, tag = 'scoped memory for tpu_custom_call.1']
    #allocation5 [shape = 'u8[8192]{0}', space=vmem, size = 0x2000, scoped, tag = 'output window, operand 0']
    %8 = vsyncpa [#allocation3], 0
    %s9 = scalar_lea.sflag [#allocation3], 1
    %10 = vsyncpa %s9, 0
    %11 = vsyncpa [#allocation4], 0
    %s12 = scalar_lea.sflag [#allocation4], 1
    %13 = vsyncpa %s12, 0
    loop: start=0, step=1, limit=4
    $region2: #{tpu_custom_call.1} parent=1 // loop_pre_header
      _
    $region3: #{tpu_custom_call.1} parent=1 // loop_header
      %s15 = sphi 0, %s19
      %p16 = scmp.ge.s32.totalorder %s15, 4
      %s22 = sphi 0, %s34
      %s23 = sphi 0, %s30
      %s24 = sphi 0, %s22
      %s25 = sphi 0, %s23
      %s26 = sphi 0, %s24
      %s27 = sphi 0, %s25
      %s39 = sphi 0, %s41
      %s42 = sphi 0, %s39
      %s43 = sphi 0, %s42
      %s59 = sphi 0, %s43
      %s63 = sphi 0, %s63
      %s65 = sphi 0, %s63
      %s66 = sphi 0, %s65
      %s80 = sphi 0, %s66
      %s84 = sphi 0, %s84
      %s86 = sphi 0, %s84
      %s87 = sphi 0, %s86
      %s101 = sphi 0, %s87
      %s109 = sphi 0, %s111
      %s112 = sphi 0, %s109
      %s113 = sphi 0, %s112
      %s129 = sphi 0, %s113
    $region4: #{tpu_custom_call.1} parent=1 // loop_header_branch
      %18 = sbr.rel (%p16) target = $region8
    $region5: #{tpu_custom_call.1} parent=1 // loop_body
      %s20 = ssub.s32 %s15, 1
      %s21 = ssub.s32 %s15, 2
      %s28 = sadd.s32 1, %s23
      %p29 = scmp.ge.s32.totalorder %s28, 1
      %s30 = scalar_select %p29, 0, %s28
      %s31 = sadd.s32 1, %s22
      %s32 = scalar_select %p29, %s31, %s22
      %p33 = scmp.ge.s32.totalorder %s32, 2
      %s34 = scalar_select %p33, 0, %s32
      %s35 = ssub.s32 %s22, %s34
      %s36 = ssub.s32 %s23, %s30
      %s37 = sor.u32 %s35, %s36
      %p38 = scmp.eq.s32.totalorder %s37, 0
      %s40 = sadd.s32 %s39, 1
      %s41 = scalar_select %p38, %s39, %s40
      %p44 = pneg %p38
      %p45 = scmp.eq.s32.totalorder %s15, 1
      %p46 = por %p44, %p45
      %p47 = scmp.ne.s32.totalorder %s39, %s42
      %p48 = scmp.eq.s32.totalorder %s15, 0
      %p49 = por %p47, %p48
      %p50 = scmp.ne.s32.totalorder %s39, %s42
      %p51 = scmp.eq.s32.totalorder %s20, 1
      %p52 = por %p50, %p51
      %p53 = scmp.ne.s32.totalorder %s42, %s43
      %p54 = scmp.eq.s32.totalorder %s20, 0
      %p55 = por %p53, %p54
      %p56 = scmp.ne.s32.totalorder %s42, %s43
      %p57 = scmp.eq.s32.totalorder %s21, 1
      %p58 = por %p56, %p57
      %p60 = scmp.ne.s32.totalorder %s43, %s59
      %p61 = scmp.eq.s32.totalorder %s21, 0
      %p62 = por %p60, %p61
      %s64 = sadd.s32 %s63, 1
      %p67 = scmp.eq.s32.totalorder %s15, 1
      %p68 = scmp.ne.s32.totalorder %s63, %s65
      %p69 = scmp.eq.s32.totalorder %s15, 0
      %p70 = por %p68, %p69
      %p71 = scmp.ne.s32.totalorder %s63, %s65
      %p72 = scmp.eq.s32.totalorder %s20, 1
      %p73 = por %p71, %p72
      %p74 = scmp.ne.s32.totalorder %s65, %s66
      %p75 = scmp.eq.s32.totalorder %s20, 0
      %p76 = por %p74, %p75
      %p77 = scmp.ne.s32.totalorder %s65, %s66
      %p78 = scmp.eq.s32.totalorder %s21, 1
      %p79 = por %p77, %p78
      %p81 = scmp.ne.s32.totalorder %s66, %s80
      %p82 = scmp.eq.s32.totalorder %s21, 0
      %p83 = por %p81, %p82
      %s85 = sadd.s32 %s84, 1
      %p88 = scmp.eq.s32.totalorder %s15, 1
      %p89 = scmp.ne.s32.totalorder %s84, %s86
      %p90 = scmp.eq.s32.totalorder %s15, 0
      %p91 = por %p89, %p90
      %p92 = scmp.ne.s32.totalorder %s84, %s86
      %p93 = scmp.eq.s32.totalorder %s20, 1
      %p94 = por %p92, %p93
      %p95 = scmp.ne.s32.totalorder %s86, %s87
      %p96 = scmp.eq.s32.totalorder %s20, 0
      %p97 = por %p95, %p96
      %p98 = scmp.ne.s32.totalorder %s86, %s87
      %p99 = scmp.eq.s32.totalorder %s21, 1
      %p100 = por %p98, %p99
      %p102 = scmp.ne.s32.totalorder %s87, %s101
      %p103 = scmp.eq.s32.totalorder %s21, 0
      %p104 = por %p102, %p103
      %s105 = ssub.s32 %s22, %s34
      %s106 = ssub.s32 %s23, %s30
      %s107 = sor.u32 %s105, %s106
      %p108 = scmp.eq.s32.totalorder %s107, 0
      %s110 = sadd.s32 %s109, 1
      %s111 = scalar_select %p108, %s109, %s110
      %p114 = pneg %p108
      %p115 = scmp.eq.s32.totalorder %s15, 1
      %p116 = por %p114, %p115
      %p117 = scmp.ne.s32.totalorder %s109, %s112
      %p118 = scmp.eq.s32.totalorder %s15, 0
      %p119 = por %p117, %p118
      %p120 = scmp.ne.s32.totalorder %s109, %s112
      %p121 = scmp.eq.s32.totalorder %s20, 1
      %p122 = por %p120, %p121
      %p123 = scmp.ne.s32.totalorder %s112, %s113
      %p124 = scmp.eq.s32.totalorder %s20, 0
      %p125 = por %p123, %p124
      %p126 = scmp.ne.s32.totalorder %s112, %s113
      %p127 = scmp.eq.s32.totalorder %s21, 1
      %p128 = por %p126, %p127
      %p130 = scmp.ne.s32.totalorder %s113, %s129
      %p131 = scmp.eq.s32.totalorder %s21, 0
      %p132 = por %p130, %p131
      %p133 = scmp.le.s32.totalorder 1, %s15
      %p134 = scmp.lt.s32.totalorder %s15, 3
      %p135 = pnand %p133, %p134
      %p136 = pneg %p135
      // Predicated region
      $region9: #{tpu_custom_call.1} parent=5 // pred_check
        _
      $region10: #{tpu_custom_call.1} parent=5 // pred_check_branch
        %138 = sbr.rel (%p135) target = $region12
      $region11: #{tpu_custom_call.1} parent=5 // pred_region
        %s139 = ssub.s32 %s15, 1
        // Predicated region
        $region13: #{tpu_custom_call.1} parent=11 // pred_check
          %p140 = pneg %p76
        $region14: #{tpu_custom_call.1} parent=11 // pred_check_branch
          %142 = sbr.rel (%p140) target = $region16
        $region15: #{tpu_custom_call.1} parent=11 // pred_region
          _
        $region16: #{tpu_custom_call.1} parent=11 // pred_fallthru
          _
        // Predicated region
        $region17: #{tpu_custom_call.1} parent=11 // pred_check
          %p143 = pneg %p97
        $region18: #{tpu_custom_call.1} parent=11 // pred_check_branch
          %145 = sbr.rel (%p143) target = $region20
        $region19: #{tpu_custom_call.1} parent=11 // pred_region
          _
        $region20: #{tpu_custom_call.1} parent=11 // pred_fallthru
          _
      $region12: #{tpu_custom_call.1} parent=5 // pred_fallthru
        _
      %p146 = scmp.lt.s32.totalorder %s15, 2
      // Predicated region
      $region21: #{tpu_custom_call.1} parent=5 // pred_check
        %p147 = pneg %p146
      $region22: #{tpu_custom_call.1} parent=5 // pred_check_branch
        %149 = sbr.rel (%p147) target = $region24
      $region23: #{tpu_custom_call.1} parent=5 // pred_region
        // Predicated region
        $region25: #{tpu_custom_call.1} parent=23 // pred_check
          %p150 = pneg %p49
        $region26: #{tpu_custom_call.1} parent=23 // pred_check_branch
          %152 = sbr.rel (%p150) target = $region28
        $region27: #{tpu_custom_call.1} parent=23 // pred_region
          %s153 = sand.u32 %s39, 1
          %s154 = scalar_lea.sflag [#allocation3], %s153
          %s155 = sand.u32 %s39, 1
          %s156 = smul.addr %s155, 8
          %s157 = scalar_lea.vmem [#allocation2], %s156
          %s159 = ssub.s32 128, 128
          %160 = vsyncadd %s154, %s159
          %s161 = smul.addr %s23, 2
          %s162 = smul.addr %s22, 2
          %s163 = sadd.s32 %s161, %s162
          %s164 = smul.addr %s163, 64
          %s165 = scalar_lea.hbm %s0, %s164
          %s167 = sshll.u32 %s157, 4
          %s168 = int_to_ptr.vmem [resolvable:$true] %s167
          %170 = dma.hbm_to_vmem [thread:$0]  %s165, 128, %s168, %s154
        $region28: #{tpu_custom_call.1} parent=23 // pred_fallthru
          _
      $region24: #{tpu_custom_call.1} parent=5 // pred_fallthru
        _
      %p171 = scmp.le.s32.totalorder 1, %s15
      %p172 = scmp.lt.s32.totalorder %s15, 3
      %p173 = pnand %p171, %p172
      %p174 = pneg %p173
      // Predicated region
      $region29: #{tpu_custom_call.1} parent=5 // pred_check
        _
      $region30: #{tpu_custom_call.1} parent=5 // pred_check_branch
        %176 = sbr.rel (%p173) target = $region32
      $region31: #{tpu_custom_call.1} parent=5 // pred_region
        %s177 = ssub.s32 %s15, 1
        %s178 = sand.u32 %s42, 1
        %s179 = scalar_lea.sflag [#allocation3], %s178
        %s180 = sand.u32 %s42, 1
        %s181 = smul.addr %s180, 8
        %s182 = scalar_lea.vmem [#allocation2], %s181
        // Predicated region
        $region33: #{tpu_custom_call.1} parent=31 // pred_check
          %p183 = pneg %p55
        $region34: #{tpu_custom_call.1} parent=31 // pred_check_branch
          %185 = sbr.rel (%p183) target = $region36
        $region35: #{tpu_custom_call.1} parent=31 // pred_region
          %186 = dma.done %s179, 128
        $region36: #{tpu_custom_call.1} parent=31 // pred_fallthru
          _
        %s187 = sand.u32 %s42, 1
        %s188 = scalar_lea.sflag [#allocation3], %s187
        %s189 = sand.u32 %s42, 1
        %s190 = smul.addr %s189, 8
        %s191 = scalar_lea.vmem [#allocation2], %s190
        %p192 = pneg %p55
        %p193 = pneg %p52
        %p194 = pneg %p76
        %p195 = pneg %p73
        %p196 = pneg %p97
        %p197 = pneg %p94
        %p198 = pneg %p125
        %p199 = pneg %p122
        %s200 = sand.u32 %s112, 1
        %s201 = scalar_lea.sflag [#allocation4], %s200
        %s202 = sand.u32 %s112, 1
        %s203 = smul.addr %s202, 8
        %s204 = scalar_lea.vmem [#allocation5], %s203
        %v205 = vld [vmem:[%s182] sm:$0xf]
        %v206 = vld [vmem:[%s182] sm:$0xff]
        %v208 = vcombine.low %v206, %v206
        %209 = vrot.lane.b32.xlu0 %v208, 127
        %v210 = vpop.permute.xlu0 %209
        %211 = vrot.lane.b32.xlu0 %v206, 127
        %v212 = vpop.permute.xlu0 %211
        %vm213 = vcmask 1039360
        %v214 = vsel %vm213, %v210, %v212
        %v216 = vcombine.high %v206, %v206
        %217 = vrot.lane.b32.xlu0 %v206, 126
        %v218 = vpop.permute.xlu0 %217
        %219 = vrot.lane.b32.xlu0 %v216, 126
        %v220 = vpop.permute.xlu0 %219
        %vm221 = vcmask 1031168
        %v222 = vsel %vm221, %v218, %v220
        %vm223 = vcmask 1043456
        %v224 = vsel %vm223, %v205, %v214
        %v225 = vld [vmem:[%s1] sm:$0xff]
        %v226 = vld [vmem:[%s2] sm:$0xff]
        %228 = vset.pattern.permute.xlu0 0
        %229 = vperm.xlu0 %228, %v226
        %v230 = vpop.permute.xlu0 %229
        %vm232 = vcmask 97280
        %v234 = vsel %vm232, %v225, 0
        %v236 = vsel %vm223, %v222, 0
        %238 = vmatprep.subr.mxu0 0.0
        %239 = vmatpush1.msra.mxu0 0.0
        %240 = vmatprep.subr.mxu0 0.0
        %241 = vmatpush1.msra.mxu0 0.0
        %242 = vmatprep.subr.mxu0 0.0
        %243 = vmatpush1.msra.mxu0 0.0
        %244 = vmatprep.subr.mxu0 0.0
        %245 = vmatpush1.msra.mxu0 0.0
        %246 = vmatprep.subr.mxu0 0.0
        %247 = vmatpush1.msra.mxu0 0.0
        %248 = vmatprep.subr.mxu0 0.0
        %249 = vmatpush1.msra.mxu0 0.0
        %250 = vmatprep.subr.mxu0 0.0
        %251 = vmatpush1.msra.mxu0 0.0
        %252 = vmatprep.subr.mxu0 0.0
        %253 = vmatpush1.msra.mxu0 0.0
        %254 = vmatprep.subr.mxu0 0.0
        %255 = vmatpush1.msra.mxu0 0.0
        %256 = vmatprep.subr.mxu0 0.0
        %257 = vmatpush1.msra.mxu0 0.0
        %258 = vmatprep.subr.mxu0 0.0
        %259 = vmatpush1.msra.mxu0 0.0
        %260 = vmatprep.subr.mxu0 0.0
        %261 = vmatpush1.msra.mxu0 0.0
        %262 = vmatprep.subr.mxu0 0.0
        %263 = vmatpush1.msra.mxu0 0.0
        %264 = vmatprep.subr.mxu0 0.0
        %265 = vmatpush1.msra.mxu0 0.0
        %266 = vmatprep.subr.mxu0 0.0
        %267 = vmatpush1.msra.mxu0 %v236
        %268 = vmatprep.subr.mxu0 0.0
        %269 = vmatpush1.msra.mxu0 %v224
        %270 = vmatprep.subr.mxu0 0.0
        %271 = vmatpush2.msra.mxu0 0.0
        %272 = vmatprep.subr.mxu0 0.0
        %273 = vmatpush2.msra.mxu0 0.0
        %274 = vmatprep.subr.mxu0 0.0
        %275 = vmatpush2.msra.mxu0 0.0
        %276 = vmatprep.subr.mxu0 0.0
        %277 = vmatpush2.msra.mxu0 0.0
        %278 = vmatprep.subr.mxu0 0.0
        %279 = vmatpush2.msra.mxu0 0.0
        %280 = vmatprep.subr.mxu0 0.0
        %281 = vmatpush2.msra.mxu0 0.0
        %282 = vmatprep.subr.mxu0 0.0
        %283 = vmatpush2.msra.mxu0 0.0
        %284 = vmatprep.subr.mxu0 0.0
        %285 = vmatpush2.msra.mxu0 0.0
        %286 = vmatprep.subr.mxu0 0.0
        %287 = vmatpush2.msra.mxu0 0.0
        %288 = vmatprep.subr.mxu0 0.0
        %289 = vmatpush2.msra.mxu0 0.0
        %290 = vmatprep.subr.mxu0 0.0
        %291 = vmatpush2.msra.mxu0 0.0
        %292 = vmatprep.subr.mxu0 0.0
        %293 = vmatpush2.msra.mxu0 0.0
        %294 = vmatprep.subr.mxu0 0.0
        %295 = vmatpush2.msra.mxu0 0.0
        %296 = vmatprep.subr.mxu0 0.0
        %297 = vmatpush2.msra.mxu0 0.0
        %298 = vmatprep.subr.mxu0 0.0
        %299 = vmatpush2.msra.mxu0 0.0
        %300 = vmatprep.subr.mxu0 0.0
        %301 = vmatpush2.msra.mxu0 0.0
        %302 = vmatprep.mubr.f32.mxu0 0.0
        %303 = vmatmul.mubr.f32.gmra.mxu0 %v234
        %v304 = vpop.f32.mrf.mxu0
        %v305 = vadd.f32 %v230, %v304
        %v306 = vpop.f32.mrf.mxu0
        %307 = vdwg.mxu0
        %308 = vst [vmem:[%s204] sm:$0xff] %v305
        %s309 = sand.u32 %s112, 1
        %s310 = scalar_lea.sflag [#allocation4], %s309
        %s311 = sand.u32 %s112, 1
        %s312 = smul.addr %s311, 8
        %s313 = scalar_lea.vmem [#allocation5], %s312
        // Predicated region
        $region37: #{tpu_custom_call.1} parent=31 // pred_check
          %p314 = pneg %p122
        $region38: #{tpu_custom_call.1} parent=31 // pred_check_branch
          %316 = sbr.rel (%p314) target = $region40
        $region39: #{tpu_custom_call.1} parent=31 // pred_region
          %s318 = ssub.s32 128, 128
          %319 = vsyncadd %s310, %s318
          %s320 = sadd.s32 %s25, %s24
          %s321 = smul.addr %s320, 128
          %s322 = scalar_lea.hbm %s3, %s321
          %s324 = sshll.u32 %s313, 4
          %s325 = int_to_ptr.vmem [resolvable:$true] %s324
          %327 = dma.vmem_to_hbm [thread:$0]  %s325, 128, %s322, %s310
        $region40: #{tpu_custom_call.1} parent=31 // pred_fallthru
          _
      $region32: #{tpu_custom_call.1} parent=5 // pred_fallthru
        _
      %p328 = scmp.le.s32.totalorder 2, %s15
      // Predicated region
      $region41: #{tpu_custom_call.1} parent=5 // pred_check
        %p329 = pneg %p328
      $region42: #{tpu_custom_call.1} parent=5 // pred_check_branch
        %331 = sbr.rel (%p329) target = $region44
      $region43: #{tpu_custom_call.1} parent=5 // pred_region
        %s332 = ssub.s32 %s15, 2
        // Predicated region
        $region45: #{tpu_custom_call.1} parent=43 // pred_check
          %p333 = pneg %p128
        $region46: #{tpu_custom_call.1} parent=43 // pred_check_branch
          %335 = sbr.rel (%p333) target = $region48
        $region47: #{tpu_custom_call.1} parent=43 // pred_region
          %s336 = sand.u32 %s113, 1
          %s337 = scalar_lea.sflag [#allocation4], %s336
          %s338 = sand.u32 %s113, 1
          %s339 = smul.addr %s338, 8
          %s340 = scalar_lea.vmem [#allocation5], %s339
          %341 = dma.done %s337, 128
        $region48: #{tpu_custom_call.1} parent=43 // pred_fallthru
          _
      $region44: #{tpu_custom_call.1} parent=5 // pred_fallthru
        _
    $region6: #{tpu_custom_call.1} parent=1 // loop_footer
      %s19 = sadd.s32 1, %s15
    $region7: #{tpu_custom_call.1} parent=1 // loop_footer_branch
      %14 = sbr.rel target = $region3
    $region8: #{tpu_custom_call.1} parent=1 // loop_exit
      _
    %342 = vsyncpa [#allocation3], 1
    %s343 = scalar_lea.sflag [#allocation3], 1
    %344 = vsyncpa %s343, 1
    %345 = vsyncpa [#allocation4], 1
    %s346 = scalar_lea.sflag [#allocation4], 1
    %347 = vsyncpa %s346, 1

</llo_original>
